<compile_context>
chip_gen: v7x
topology: tpu7x:2x2x1
jax: 0.10.0
libtpu: 0.0.40
codegen_flags: <defaults>
</compile_context>

<pallas_src>
import math

import jax
import jax.numpy as jnp
from jax.experimental import pallas as pl
from jax.experimental.pallas import tpu as pltpu

NUM_NUCL = 4  # F.one_hot(X_nucl, num_classes=4); embed_dim must equal 4 for the PE add.


def _seq_embed_kernel(tok_ref, pad_ref, pe_ref, eids_ref, r_ref, o_ref):
    # tok_ref:  (TB, L)   int32   token ids (0..3)
    # pad_ref:  (TB, L)   float32 nonzero => padded position
    # pe_ref:   (1, LE)   float32 positional encoding, flattened (l*E + e) order
    # eids_ref: (1, LE)   float32 class index per flattened lane (arange(LE) % E)
    # r_ref:    (L, LE)   float32 constant expansion matrix: R[l, f] = (f // E == l)
    # o_ref:    (TB, LE)  float32 flattened embedded output
    tok = tok_ref[...].astype(jnp.float32)                     # (TB, L)
    pad = pad_ref[...]                                         # (TB, L)

    # Fold padding into the token code: padded positions get -1 (never a class).
    code = jnp.where(pad != 0.0, -1.0, tok)                    # (TB, L)

    # Lane-expand each per-position value E times: (TB, L) @ (L, LE) on the MXU.
    # Exact for the small integer values involved.
    code_exp = jnp.dot(code, r_ref[...],
                       preferred_element_type=jnp.float32)     # (TB, LE)

    # One-hot: lane f holds class (f % E); compare against the expanded token.
    onehot = (jnp.abs(code_exp - eids_ref[...]) < 0.5).astype(jnp.float32)
    # Keep-mask: padded positions (code == -1) zero out one-hot AND the PE term,
    # matching masked_fill(padding_mask, 0).
    keep = (code_exp > -0.5).astype(jnp.float32)

    o_ref[...] = (onehot + pe_ref[...]) * keep


def make_position_encoding(sequence_length: int, embed_dim: int) -> jnp.ndarray:
    """Deterministic sinusoidal PE identical to the PyTorch __init__."""
    position = jnp.arange(sequence_length, dtype=jnp.float32)[:, None]           # (L, 1)
    div_term = jnp.exp(
        jnp.arange(0, embed_dim, 2, dtype=jnp.float32) * (-math.log(10000.0) / embed_dim)
    )
    pe = jnp.zeros((sequence_length, embed_dim), dtype=jnp.float32)
    pe = pe.at[:, 0::2].set(jnp.sin(position * div_term))
    pe = pe.at[:, 1::2].set(jnp.cos(position * div_term))
    return pe


def sequence_embedder(x_nucl: jnp.ndarray,
                      position_encoding: jnp.ndarray,
                      padding_mask=None) -> jnp.ndarray:
    """x_nucl: (B, L) int32 tokens in [0, 4); position_encoding: (Lmax, E) f32;
    padding_mask: None, (B, L) or (B, L, E); nonzero/True => padded.
    Returns (B, L, E) float32, matching the PyTorch forward."""
    B, L = x_nucl.shape
    E = position_encoding.shape[1]
    if E != NUM_NUCL:
        # F.one_hot is fixed at 4 classes; the PE broadcast add requires embed_dim == 4.
        raise ValueError(f"embed_dim must be {NUM_NUCL} for onehot=True, got {E}")
    LE = L * E

    # Compact (B, L) padding mask. Padding is per-position, so a 3-D mask is
    # reduced over the embed axis (any nonzero => padded).
    if padding_mask is None:
        pad2d = jnp.zeros((B, L), jnp.float32)
    elif padding_mask.ndim == 3:
        pad2d = jnp.any(padding_mask != 0, axis=-1).astype(jnp.float32)
    else:
        pad2d = (padding_mask != 0).astype(jnp.float32)

    # Tiny constant tables (O(L*E) / O(L^2*E) bytes), loaded into VMEM once
    # (constant index_map => no re-DMA across grid steps).
    pe_flat = position_encoding[:L].reshape(1, LE).astype(jnp.float32)          # (1, LE)
    e_ids = (jnp.arange(LE, dtype=jnp.int32) % E).astype(jnp.float32)[None, :]  # (1, LE)
    lane = jnp.arange(LE, dtype=jnp.int32)[None, :]
    pos = jnp.arange(L, dtype=jnp.int32)[:, None]
    r_mat = ((lane // E) == pos).astype(jnp.float32)                            # (L, LE)

    # Batch-tile size: ~1 MiB of f32 output per grid step (amortizes the ~0.35us
    # per-step overhead) while keeping double-buffered tiles well inside the
    # scoped-VMEM defaults of all generations (16/32/32 MiB on v5e/v6e/v7x).
    row_bytes = LE * 4
    tb = max(1, min(B, (1 << 20) // max(row_bytes, 1)))
    if tb < B:
        tb = max(8, (tb // 8) * 8)  # sublane-aligned blocks when tiling the batch

    out_flat = pl.pallas_call(
        _seq_embed_kernel,
        out_shape=jax.ShapeDtypeStruct((B, LE), jnp.float32),
        grid_spec=pltpu.PrefetchScalarGridSpec(
            num_scalar_prefetch=0,
            grid=(pl.cdiv(B, tb),),
            in_specs=[
                pl.BlockSpec((tb, L), lambda b: (b, 0)),    # tokens (compact)
                pl.BlockSpec((tb, L), lambda b: (b, 0)),    # padding mask (compact)
                pl.BlockSpec((1, LE), lambda b: (0, 0)),    # PE, shared / resident
                pl.BlockSpec((1, LE), lambda b: (0, 0)),    # class ids per lane
                pl.BlockSpec((L, LE), lambda b: (0, 0)),    # expansion matrix
            ],
            out_specs=pl.BlockSpec((tb, LE), lambda b: (b, 0)),  # lane-dense output
        ),
        compiler_params=pltpu.CompilerParams(
            # Batch-tile axis is independent -> shard across v7x's two TensorCores.
            dimension_semantics=("parallel",),
        ),
    )(x_nucl, pad2d, pe_flat, e_ids, r_mat)

    return out_flat.reshape(B, L, E)  # contiguous reshape: free, no data movement


if __name__ == "__main__":
    key = jax.random.PRNGKey(0)
    k1, k2 = jax.random.split(key)

    B, L, E = 2, 16, 4          # small shapes; module default embed_dim=4
    SEQ_LEN_MAX = 99            # module's sequence_length

    # Deterministic inputs. Tokens are assumed in [0, 4) (PyTorch F.one_hot would
    # raise on out-of-range; here they would just produce an all-zero one-hot row).
    x_nucl = jax.random.randint(k1, (B, L), 0, 4, dtype=jnp.int32)
    pad_positions = jax.random.bernoulli(k2, 0.2, (B, L))            # (B, L) bool

    pe = make_position_encoding(SEQ_LEN_MAX, E)                      # (99, 4)

    out = sequence_embedder(x_nucl, pe, pad_positions)
    out = jax.block_until_ready(out)

    # Reference in plain JAX (mirrors the PyTorch forward exactly, with the
    # padding mask broadcast to (B, L, E) as the module expects).
    ref = jax.nn.one_hot(x_nucl, NUM_NUCL, dtype=jnp.float32) + pe[None, :L, :]
    ref = jnp.where(pad_positions[:, :, None], 0.0, ref)

    assert out.shape == (B, L, E) and out.dtype == jnp.float32
    assert jnp.allclose(out, ref, atol=1e-6), "mismatch vs reference"

    print("KERNEL_OK")
</pallas_src>

<mosaic_0001>
module attributes {stable_mosaic.version = 11 : i64} {
  func.func @_seq_embed_kernel(%arg0: i32, %arg1: memref<2x16xi32, #tpu.memory_space<vmem>>, %arg2: memref<2x16xf32, #tpu.memory_space<vmem>>, %arg3: memref<1x64xf32, #tpu.memory_space<vmem>>, %arg4: memref<1x64xf32, #tpu.memory_space<vmem>>, %arg5: memref<16x64xf32, #tpu.memory_space<vmem>>, %arg6: memref<2x64xf32, #tpu.memory_space<vmem>>) attributes {dimension_semantics = [#tpu.dimension_semantics<parallel>], iteration_bounds = array<i64: 1>, scalar_prefetch = 0 : i64, scratch_operands = 0 : i64, tpu.core_type = #tpu.core_type<tc>, window_params = [{transform_indices = @transform_0, window_bounds = array<i64: 2, 16>}, {transform_indices = @transform_1, window_bounds = array<i64: 2, 16>}, {pipeline_mode = #tpu.pipeline_mode<synchronous>, transform_indices = @transform_2, window_bounds = array<i64: 1, 64>}, {pipeline_mode = #tpu.pipeline_mode<synchronous>, transform_indices = @transform_3, window_bounds = array<i64: 1, 64>}, {pipeline_mode = #tpu.pipeline_mode<synchronous>, transform_indices = @transform_4, window_bounds = array<i64: 16, 64>}, {transform_indices = @transform_5, window_bounds = array<i64: 2, 64>}]} {
    %c0 = arith.constant 0 : index
    %c0_0 = arith.constant 0 : index
    %0 = vector.load %arg1[%c0, %c0_0] : memref<2x16xi32, #tpu.memory_space<vmem>>, vector<2x16xi32>
    %1 = arith.sitofp %0 : vector<2x16xi32> to vector<2x16xf32>
    %c0_1 = arith.constant 0 : index
    %c0_2 = arith.constant 0 : index
    %2 = vector.load %arg2[%c0_1, %c0_2] : memref<2x16xf32, #tpu.memory_space<vmem>>, vector<2x16xf32>
    %cst = arith.constant 0.000000e+00 : f32
    %3 = vector.broadcast %cst : f32 to vector<2x16xf32>
    %4 = arith.cmpf one, %2, %3 : vector<2x16xf32>
    %cst_3 = arith.constant -1.000000e+00 : f32
    %5 = vector.broadcast %cst_3 : f32 to vector<2x16xf32>
    %6 = arith.select %4, %5, %1 : vector<2x16xi1>, vector<2x16xf32>
    %c0_4 = arith.constant 0 : index
    %c0_5 = arith.constant 0 : index
    %7 = vector.load %arg5[%c0_4, %c0_5] : memref<16x64xf32, #tpu.memory_space<vmem>>, vector<16x64xf32>
    %cst_6 = arith.constant dense<0.000000e+00> : vector<2x64xf32>
    %8 = tpu.matmul %6, %7, %cst_6 {dimension_numbers = #tpu.dot_dimension_numbers<[1], [0], [0], [1], [0, 0, 1, 1], [], []>} : vector<2x16xf32>, vector<16x64xf32>, vector<2x64xf32> -> vector<2x64xf32>
    %c0_7 = arith.constant 0 : index
    %c0_8 = arith.constant 0 : index
    %9 = vector.load %arg4[%c0_7, %c0_8] : memref<1x64xf32, #tpu.memory_space<vmem>>, vector<1x64xf32>
    %10 = vector.broadcast %9 : vector<1x64xf32> to vector<2x64xf32>
    %11 = arith.subf %8, %10 : vector<2x64xf32>
    %12 = math.absf %11 : vector<2x64xf32>
    %cst_9 = arith.constant 5.000000e-01 : f32
    %13 = vector.broadcast %cst_9 : f32 to vector<2x64xf32>
    %14 = arith.cmpf olt, %12, %13 : vector<2x64xf32>
    %15 = arith.extui %14 : vector<2x64xi1> to vector<2x64xi32>
    %16 = arith.sitofp %15 : vector<2x64xi32> to vector<2x64xf32>
    %cst_10 = arith.constant -5.000000e-01 : f32
    %17 = vector.broadcast %cst_10 : f32 to vector<2x64xf32>
    %18 = arith.cmpf ogt, %8, %17 : vector<2x64xf32>
    %19 = arith.extui %18 : vector<2x64xi1> to vector<2x64xi32>
    %20 = arith.sitofp %19 : vector<2x64xi32> to vector<2x64xf32>
    %c0_11 = arith.constant 0 : index
    %c0_12 = arith.constant 0 : index
    %21 = vector.load %arg3[%c0_11, %c0_12] : memref<1x64xf32, #tpu.memory_space<vmem>>, vector<1x64xf32>
    %22 = vector.broadcast %21 : vector<1x64xf32> to vector<2x64xf32>
    %23 = arith.addf %16, %22 : vector<2x64xf32>
    %24 = arith.mulf %23, %20 : vector<2x64xf32>
    %c0_13 = arith.constant 0 : index
    %c0_14 = arith.constant 0 : index
    %25 = vector.load %arg6[%c0_13, %c0_14] : memref<2x64xf32, #tpu.memory_space<vmem>>, vector<2x64xf32>
    tpu.vector_store %arg6[%c0_13, %c0_14], %24 {strides = array<i32>} : memref<2x64xf32, #tpu.memory_space<vmem>>, vector<2x64xf32>,
    return
  }
  func.func @transform_0(%arg0: i32) -> (i32, i32) {
    %c0_i32 = arith.constant 0 : i32
    %c0_i32_0 = arith.constant 0 : i32
    return %arg0, %c0_i32 : i32, i32
  }
  func.func @transform_1(%arg0: i32) -> (i32, i32) {
    %c0_i32 = arith.constant 0 : i32
    %c0_i32_0 = arith.constant 0 : i32
    return %arg0, %c0_i32 : i32, i32
  }
  func.func @transform_2(%arg0: i32) -> (i32, i32) {
    %c0_i32 = arith.constant 0 : i32
    %c0_i32_0 = arith.constant 0 : i32
    %c0_i32_1 = arith.constant 0 : i32
    return %c0_i32, %c0_i32_0 : i32, i32
  }
  func.func @transform_3(%arg0: i32) -> (i32, i32) {
    %c0_i32 = arith.constant 0 : i32
    %c0_i32_0 = arith.constant 0 : i32
    %c0_i32_1 = arith.constant 0 : i32
    return %c0_i32, %c0_i32_0 : i32, i32
  }
  func.func @transform_4(%arg0: i32) -> (i32, i32) {
    %c0_i32 = arith.constant 0 : i32
    %c0_i32_0 = arith.constant 0 : i32
    %c0_i32_1 = arith.constant 0 : i32
    return %c0_i32, %c0_i32_0 : i32, i32
  }
  func.func @transform_5(%arg0: i32) -> (i32, i32) {
    %c0_i32 = arith.constant 0 : i32
    %c0_i32_0 = arith.constant 0 : i32
    return %arg0, %c0_i32 : i32, i32
  }
}

</mosaic_0001>

<llo_original>
// kernel: tpu_custom_call.1
$region0: #{tpu_custom_call.1}
  #allocation0 [shape = 'u32[]', space=smem, size = 0x4, offset = 0x4, fixed_abs, tag = 'smem constant byte address 0x4 - core index']
  #allocation1 [shape = 'u32[144,128]{1,0:T(1,128)}', space=vmem, size = 0x12000, scoped, tag = 'internal scratch']
  %s0 = inlined_call_operand.hbm [shape: s32[2,16], index: 0, kind: input, shape index: {}]
  %s1 = inlined_call_operand.vmem [shape: f32[2,16], index: 1, kind: input, shape index: {}]
  %s2 = inlined_call_operand.vmem [shape: f32[1,64], index: 2, kind: input, shape index: {}]
  %s3 = inlined_call_operand.vmem [shape: f32[1,64], index: 3, kind: input, shape index: {}]
  %s4 = inlined_call_operand.hbm [shape: f32[16,64], index: 4, kind: input, shape index: {}]
  %s5 = inlined_call_operand.hbm [shape: f32[2,64], index: 5, kind: output, shape index: {}]
  %s6 = sld [smem:[#allocation0]]
  $region38: #{tpu_custom_call.1} parent=0
    _
  %s8 = ssub.s32 1, %s6
  %s9 = scalar_select 0, %s8, %s6
  $region1: #{tpu_custom_call.1} parent=0
    #allocation2 [shape = 'u8[1024]{0}', space=vmem, size = 0x400, scoped, tag = 'input window, operand 0, single buffered']
    #allocation3 [shape = 's32[1]{0}', space=sflag, size = 0x4, scoped, tag = 'scoped memory for tpu_custom_call.1']
    #allocation4 [shape = 's32[1]{0}', space=sflag, size = 0x4, scoped, tag = 'scoped memory for tpu_custom_call.1']
    #allocation5 [shape = 'u8[8192]{0}', space=vmem, size = 0x2000, scoped, tag = 'input window, operand 4, single buffered']
    #allocation6 [shape = 's32[1]{0}', space=sflag, size = 0x4, scoped, tag = 'scoped memory for tpu_custom_call.1']
    #allocation7 [shape = 'u8[1024]{0}', space=vmem, size = 0x400, scoped, tag = 'output window, operand 0, single buffered']
    %10 = vsyncpa [#allocation3], 0
    %11 = vsyncpa [#allocation6], 0
    %12 = vsyncpa [#allocation4], 0
    // Predicated region
    $region2: #{tpu_custom_call.1} parent=1 // pred_check
      _
    $region3: #{tpu_custom_call.1} parent=1 // pred_check_branch
      %14 = sbr.rel (0) target = $region5
    $region4: #{tpu_custom_call.1} parent=1 // pred_region
      %s16 = ssub.s32 32, 32
      %17 = vsyncadd [#allocation3], %s16
      %s19 = sshll.u32 [#allocation2], 4
      %s20 = int_to_ptr.vmem [resolvable:$true] %s19
      %22 = dma.hbm_to_vmem [thread:$0]  %s0, 32, %s20, [#allocation3]
    $region5: #{tpu_custom_call.1} parent=1 // pred_fallthru
      _
    // Predicated region
    $region6: #{tpu_custom_call.1} parent=1 // pred_check
      _
    $region7: #{tpu_custom_call.1} parent=1 // pred_check_branch
      %24 = sbr.rel (0) target = $region9
    $region8: #{tpu_custom_call.1} parent=1 // pred_region
      _
    $region9: #{tpu_custom_call.1} parent=1 // pred_fallthru
      _
    // Predicated region
    $region10: #{tpu_custom_call.1} parent=1 // pred_check
      _
    $region11: #{tpu_custom_call.1} parent=1 // pred_check_branch
      %26 = sbr.rel (0) target = $region13
    $region12: #{tpu_custom_call.1} parent=1 // pred_region
      _
    $region13: #{tpu_custom_call.1} parent=1 // pred_fallthru
      _
    // Predicated region
    $region14: #{tpu_custom_call.1} parent=1 // pred_check
      _
    $region15: #{tpu_custom_call.1} parent=1 // pred_check_branch
      %28 = sbr.rel (0) target = $region17
    $region16: #{tpu_custom_call.1} parent=1 // pred_region
      _
    $region17: #{tpu_custom_call.1} parent=1 // pred_fallthru
      _
    // Predicated region
    $region18: #{tpu_custom_call.1} parent=1 // pred_check
      _
    $region19: #{tpu_custom_call.1} parent=1 // pred_check_branch
      %30 = sbr.rel (0) target = $region21
    $region20: #{tpu_custom_call.1} parent=1 // pred_region
      %s32 = ssub.s32 256, 256
      %33 = vsyncadd [#allocation6], %s32
      %s34 = sshll.u32 [#allocation5], 4
      %s35 = int_to_ptr.vmem [resolvable:$true] %s34
      %40 = dma.hbm_to_vmem [thread:$0]  %s4, 256, %s35, [#allocation6], 128, 128, 8
    $region21: #{tpu_custom_call.1} parent=1 // pred_fallthru
      _
    // Predicated region
    $region22: #{tpu_custom_call.1} parent=1 // pred_check
      _
    $region23: #{tpu_custom_call.1} parent=1 // pred_check_branch
      %42 = sbr.rel (0) target = $region25
    $region24: #{tpu_custom_call.1} parent=1 // pred_region
      %43 = dma.done [#allocation3], 32
    $region25: #{tpu_custom_call.1} parent=1 // pred_fallthru
      _
    // Predicated region
    $region26: #{tpu_custom_call.1} parent=1 // pred_check
      _
    $region27: #{tpu_custom_call.1} parent=1 // pred_check_branch
      %45 = sbr.rel (0) target = $region29
    $region28: #{tpu_custom_call.1} parent=1 // pred_region
      %46 = dma.done [#allocation6], 256
    $region29: #{tpu_custom_call.1} parent=1 // pred_fallthru
      _
    %v47 = vld [vmem:[#allocation2] sm:$0x3]
    %v48 = vcvt.s32.f32 %v47
    %v49 = vld [vmem:[%s1] sm:$0x3]
    %vm50 = vcmp.ne.f32.partialorder %v49, 0.0
    %v51 = vsel %vm50, -1.0, %v48
    %v52 = vld [vmem:[#allocation5] sm:$0xff]
    %v53 = vld [vmem:[#allocation5 + $0x8] sm:$0xff]
    %vm54 = vcmask 130048
    %v56 = vsel %vm54, %v51, 0
    %58 = vmatprep.subr.mxu0 0.0
    %59 = vmatpush1.msra.mxu0 %v52
    %60 = vmatprep.subr.mxu0 0.0
    %61 = vmatpush1.msra.mxu0 %v53
    %62 = vmatprep.subr.mxu0 0.0
    %63 = vmatpush1.msra.mxu0 0.0
    %64 = vmatprep.subr.mxu0 0.0
    %65 = vmatpush1.msra.mxu0 0.0
    %66 = vmatprep.subr.mxu0 0.0
    %67 = vmatpush1.msra.mxu0 0.0
    %68 = vmatprep.subr.mxu0 0.0
    %69 = vmatpush1.msra.mxu0 0.0
    %70 = vmatprep.subr.mxu0 0.0
    %71 = vmatpush1.msra.mxu0 0.0
    %72 = vmatprep.subr.mxu0 0.0
    %73 = vmatpush1.msra.mxu0 0.0
    %74 = vmatprep.subr.mxu0 0.0
    %75 = vmatpush1.msra.mxu0 0.0
    %76 = vmatprep.subr.mxu0 0.0
    %77 = vmatpush1.msra.mxu0 0.0
    %78 = vmatprep.subr.mxu0 0.0
    %79 = vmatpush1.msra.mxu0 0.0
    %80 = vmatprep.subr.mxu0 0.0
    %81 = vmatpush1.msra.mxu0 0.0
    %82 = vmatprep.subr.mxu0 0.0
    %83 = vmatpush1.msra.mxu0 0.0
    %84 = vmatprep.subr.mxu0 0.0
    %85 = vmatpush1.msra.mxu0 0.0
    %86 = vmatprep.subr.mxu0 0.0
    %87 = vmatpush1.msra.mxu0 0.0
    %88 = vmatprep.subr.mxu0 0.0
    %89 = vmatpush1.msra.mxu0 0.0
    %90 = vmatprep.subr.mxu0 0.0
    %91 = vmatpush1.msra.mxu0 0.0
    %92 = vmatprep.subr.mxu0 0.0
    %93 = vmatpush1.msra.mxu0 0.0
    %94 = vmatprep.subr.mxu0 0.0
    %95 = vmatpush1.msra.mxu0 0.0
    %96 = vmatprep.subr.mxu0 0.0
    %97 = vmatpush1.msra.mxu0 0.0
    %98 = vmatprep.subr.mxu0 0.0
    %99 = vmatpush1.msra.mxu0 0.0
    %100 = vmatprep.subr.mxu0 0.0
    %101 = vmatpush1.msra.mxu0 0.0
    %102 = vmatprep.subr.mxu0 0.0
    %103 = vmatpush1.msra.mxu0 0.0
    %104 = vmatprep.subr.mxu0 0.0
    %105 = vmatpush1.msra.mxu0 0.0
    %106 = vmatprep.subr.mxu0 0.0
    %107 = vmatpush1.msra.mxu0 0.0
    %108 = vmatprep.subr.mxu0 0.0
    %109 = vmatpush1.msra.mxu0 0.0
    %110 = vmatprep.subr.mxu0 0.0
    %111 = vmatpush1.msra.mxu0 0.0
    %112 = vmatprep.subr.mxu0 0.0
    %113 = vmatpush1.msra.mxu0 0.0
    %114 = vmatprep.subr.mxu0 0.0
    %115 = vmatpush1.msra.mxu0 0.0
    %116 = vmatprep.subr.mxu0 0.0
    %117 = vmatpush1.msra.mxu0 0.0
    %118 = vmatprep.subr.mxu0 0.0
    %119 = vmatpush1.msra.mxu0 0.0
    %120 = vmatprep.subr.mxu0 0.0
    %121 = vmatpush1.msra.mxu0 0.0
    %122 = vmatprep.mubr.f32.mxu0 0.0
    %123 = vmatmul.mubr.f32.gmra.mrb[0].mxu0 %v56
    %v124 = vpop.f32.mrb[0].mxu0
    %v125 = vadd.f32 0.0, %v124
    %v126 = vpop.f32.mrb[0].mxu0
    %127 = vdwg.mxu0
    %v128 = vld [vmem:[%s3] sm:$0x1]
    %v130 = vlaneseq
    %v131 = vshrl.u32 %v130, 7
    %v132 = vsub.s32 0, %v131
    %v133 = vrot.slane %v128, %v132
    %v135 = vsub.f32 %v125, %v133
    %v136 = vand.u32 2147483647, %v135
    %vm137 = vcmp.lt.f32.partialorder %v136, 0.5
    %v138 = vsel %vm137, 1, 0
    %v139 = vcvt.s32.f32 %v138
    %vm140 = vcmp.gt.f32.partialorder %v125, -0.5
    %v141 = vsel %vm140, 1, 0
    %v142 = vcvt.s32.f32 %v141
    %v143 = vld [vmem:[%s2] sm:$0x1]
    %v145 = vlaneseq
    %v146 = vshrl.u32 %v145, 7
    %v147 = vsub.s32 0, %v146
    %v148 = vrot.slane %v143, %v147
    %v150 = vadd.f32 %v139, %v148
    %v151 = vmul.f32 %v150, %v142
    %vm152 = vcmask 517120
    %153 = vst.msk [vmem:[#allocation7] sm:$0x3] %vm152, %v151
    // Predicated region
    $region30: #{tpu_custom_call.1} parent=1 // pred_check
      _
    $region31: #{tpu_custom_call.1} parent=1 // pred_check_branch
      %155 = sbr.rel (0) target = $region33
    $region32: #{tpu_custom_call.1} parent=1 // pred_region
      %s157 = ssub.s32 32, 32
      %158 = vsyncadd [#allocation4], %s157
      %s160 = sshll.u32 [#allocation7], 4
      %s161 = int_to_ptr.vmem [resolvable:$true] %s160
      %163 = dma.vmem_to_hbm [thread:$0]  %s161, 32, %s5, [#allocation4]
    $region33: #{tpu_custom_call.1} parent=1 // pred_fallthru
      _
    // Predicated region
    $region34: #{tpu_custom_call.1} parent=1 // pred_check
      _
    $region35: #{tpu_custom_call.1} parent=1 // pred_check_branch
      %165 = sbr.rel (0) target = $region37
    $region36: #{tpu_custom_call.1} parent=1 // pred_region
      %166 = dma.done [#allocation4], 32
    $region37: #{tpu_custom_call.1} parent=1 // pred_fallthru
      _
    %167 = vsyncpa [#allocation3], 1
    %168 = vsyncpa [#allocation6], 1
    %169 = vsyncpa [#allocation4], 1

</llo_original>
